<compile_context>
chip_gen: v5e
topology: v5e:2x2
jax: 0.10.0
libtpu: 0.0.40
codegen_flags: <defaults>
</compile_context>

<pallas_src>
import jax
import jax.numpy as jnp
from jax.experimental import pallas as pl
from jax.experimental.pallas import tpu as pltpu


# --------------------------------------------------------------------------- kernels


def feature_transform_kernel(wt_ref, ht_ref, out_ref):
    """out[:, j_tile] = W^T @ H^T[:, j_tile]  (tiny contraction, lane-dense output)."""
    w = wt_ref[...].astype(jnp.float32)
    h = ht_ref[...].astype(jnp.float32)
    out_ref[...] = jnp.dot(w, h, preferred_element_type=jnp.float32).astype(out_ref.dtype)


def gcn_propagate_kernel(zt_ref, at_ref, bt_ref, out_ref, acc_ref):
    """H_out^T[:, j] = relu( sum_k Z^T[:, k] @ A_hat^T[k, j] + b ), accumulated over k."""
    k = pl.program_id(1)

    @pl.when(k == 0)
    def _():
        acc_ref[...] = jnp.zeros_like(acc_ref)

    acc_ref[...] += jnp.dot(zt_ref[...], at_ref[...],
                            preferred_element_type=jnp.float32)

    @pl.when(k == pl.num_programs(1) - 1)
    def _():
        out_ref[...] = jnp.maximum(acc_ref[...] + bt_ref[...], 0.0).astype(out_ref.dtype)


def head_kernel(ht_ref, pt_ref, wl_ref, bl_ref, out_ref, emb_ref, acc_ref):
    """pooled^T = sum_k H^T[:, k] @ P^T[k, :];  out = sigmoid(Wl^T @ pooled^T + bl)."""
    k = pl.program_id(0)

    @pl.when(k == 0)
    def _():
        acc_ref[...] = jnp.zeros_like(acc_ref)

    # bf16 x bf16 -> f32 accumulate directly on the MXU (P entries are exact 0/1 in bf16).
    acc_ref[...] += jnp.dot(ht_ref[...], pt_ref[...],
                            preferred_element_type=jnp.float32)

    @pl.when(k == pl.num_programs(0) - 1)
    def _():
        pooled_t = acc_ref[...]                                  # [H2, B_pad]
        emb_ref[...] = pooled_t
        logits = jnp.dot(wl_ref[...], pooled_t,
                         preferred_element_type=jnp.float32) + bl_ref[...]
        out_ref[...] = jax.nn.sigmoid(logits)


# ------------------------------------------------------------------- pallas wrappers


def _round_up(v, m):
    return ((v + m - 1) // m) * m


def _mosaic_params(dimension_semantics, working_set_bytes):
    # double-buffered tiles + headroom; floor = v5e scoped default, cap safe for v7x (64 MiB).
    est = 2 * working_set_bytes + (4 << 20)
    return pltpu.CompilerParams(
        dimension_semantics=dimension_semantics,
        vmem_limit_bytes=int(min(max(est, 16 << 20), 48 << 20)),
    )


def _feature_transform(wt, ht, tile):
    h_out, f_in = wt.shape
    n_pad = ht.shape[1]
    ws = wt.size * 4 + f_in * tile * ht.dtype.itemsize + h_out * tile * 2
    return pl.pallas_call(
        feature_transform_kernel,
        out_shape=jax.ShapeDtypeStruct((h_out, n_pad), jnp.bfloat16),
        grid_spec=pltpu.PrefetchScalarGridSpec(
            num_scalar_prefetch=0,
            grid=(n_pad // tile,),
            in_specs=[
                pl.BlockSpec((h_out, f_in), lambda j: (0, 0)),   # tiny resident W^T
                pl.BlockSpec((f_in, tile), lambda j: (0, j)),    # lane-dense input tile
            ],
            out_specs=pl.BlockSpec((h_out, tile), lambda j: (0, j)),
        ),
        compiler_params=_mosaic_params(("parallel",), ws),
    )(wt, ht)


def _gcn_propagate(zt, at, bt, tile):
    h, n_pad = zt.shape
    ws = tile * tile * at.dtype.itemsize + 2 * h * tile * 2 + h * tile * 4
    return pl.pallas_call(
        gcn_propagate_kernel,
        out_shape=jax.ShapeDtypeStruct((h, n_pad), jnp.bfloat16),
        grid_spec=pltpu.PrefetchScalarGridSpec(
            num_scalar_prefetch=0,
            grid=(n_pad // tile, n_pad // tile),                  # (out-col tiles, k tiles)
            in_specs=[
                pl.BlockSpec((h, tile), lambda j, k: (0, k)),     # Z^T contraction tile (tiny)
                pl.BlockSpec((tile, tile), lambda j, k: (k, j)),  # streamed bf16 A_hat^T tile
                pl.BlockSpec((h, 1), lambda j, k: (0, 0)),        # bias column
            ],
            out_specs=pl.BlockSpec((h, tile), lambda j, k: (0, j)),
            scratch_shapes=[pltpu.VMEM((h, tile), jnp.float32)],
        ),
        compiler_params=_mosaic_params(("parallel", "arbitrary"), ws),
    )(zt, at, bt)


def _pool_head(ht, pt, wlt, blt, tile):
    h, n_pad = ht.shape
    b_pad = pt.shape[1]
    ws = h * tile * 2 + tile * b_pad * pt.dtype.itemsize + h * b_pad * 4
    return pl.pallas_call(
        head_kernel,
        out_shape=(
            jax.ShapeDtypeStruct((1, b_pad), jnp.float32),        # sigmoid output (transposed)
            jax.ShapeDtypeStruct((h, b_pad), jnp.float32),        # pooled embeddings (transposed)
        ),
        grid_spec=pltpu.PrefetchScalarGridSpec(
            num_scalar_prefetch=0,
            grid=(n_pad // tile,),
            in_specs=[
                pl.BlockSpec((h, tile), lambda k: (0, k)),
                pl.BlockSpec((tile, b_pad), lambda k: (k, 0)),
                pl.BlockSpec((1, h), lambda k: (0, 0)),
                pl.BlockSpec((1, 1), lambda k: (0, 0)),
            ],
            out_specs=(
                pl.BlockSpec((1, b_pad), lambda k: (0, 0)),
                pl.BlockSpec((h, b_pad), lambda k: (0, 0)),
            ),
            scratch_shapes=[pltpu.VMEM((h, b_pad), jnp.float32)],
        ),
        compiler_params=_mosaic_params(("arbitrary",), ws),
    )(ht, pt, wlt, blt)


# ---------------------------------------------------------------------- host-side glue


def build_normalized_adjacency_t(edge_index, num_nodes, n_pad):
    """A_hat^T zero-padded to [n_pad, n_pad], with A_hat[dst, src] = d^-1/2[src]*d^-1/2[dst]
    and self loops added (matches torch_geometric GCNConv gcn_norm)."""
    src = edge_index[0]
    dst = edge_index[1]
    loops = jnp.arange(num_nodes, dtype=src.dtype)
    src = jnp.concatenate([src, loops])
    dst = jnp.concatenate([dst, loops])
    deg = jnp.zeros((num_nodes,), jnp.float32).at[dst].add(1.0)
    dinv = jnp.where(deg > 0, 1.0 / jnp.sqrt(deg), 0.0)
    norm = dinv[src] * dinv[dst]
    return jnp.zeros((n_pad, n_pad), jnp.float32).at[src, dst].add(norm)


def build_pooling_matrix_t(batch, num_graphs, n_pad, b_pad):
    """P^T[n, b] = 1.0 iff node n belongs to graph b (zeros in the padding)."""
    onehot = (batch[:, None] == jnp.arange(num_graphs)[None, :]).astype(jnp.float32)
    return jnp.zeros((n_pad, b_pad), jnp.float32).at[:batch.shape[0], :num_graphs].set(onehot)


def gcn_conv_forward(x, edge_index, batch, params, num_graphs, *, max_tile=512):
    n, f = x.shape
    w1, b1, w2, b2, wl, bl = params
    h1 = w1.shape[1]
    h2 = w2.shape[1]

    tile = min(max_tile, _round_up(n, 128))
    n_pad = _round_up(n, tile)
    f_pad = _round_up(f, 8)
    b_pad = _round_up(num_graphs, 8)

    # graph structure -> dense padded operands, lane-dense (transposed) layout
    at = build_normalized_adjacency_t(edge_index, n, n_pad).astype(jnp.bfloat16)
    pt = build_pooling_matrix_t(batch, num_graphs, n_pad, b_pad).astype(jnp.bfloat16)
    xt = jnp.zeros((f_pad, n_pad), jnp.float32).at[:f, :n].set(x.T)

    w1t = jnp.zeros((h1, f_pad), jnp.float32).at[:, :f].set(w1.T)
    b1t = b1.T                                   # [h1, 1]
    w2t = w2.T                                   # [h2, h1]
    b2t = b2.T                                   # [h2, 1]
    wlt = wl.T                                   # [1, h2]
    blt = bl                                     # [1, 1]

    # GCN layer 1: relu(A_hat @ (X W1) + b1)
    z1t = _feature_transform(w1t, xt, tile)      # (X @ W1)^T       [h1, n_pad] bf16
    h1t = _gcn_propagate(z1t, at, b1t, tile)     # relu(A Z + b)^T  [h1, n_pad] bf16
    # GCN layer 2: relu(A_hat @ (H1 W2) + b2)
    z2t = _feature_transform(w2t, h1t, tile)     # (H1 @ W2)^T      [h2, n_pad] bf16
    h2t = _gcn_propagate(z2t, at, b2t, tile)     # relu(A Z + b)^T  [h2, n_pad] bf16
    # per-graph sum pooling + last_linear + sigmoid
    out_t, emb_t = _pool_head(h2t, pt, wlt, blt, tile)

    out = out_t.T[:num_graphs, :]                # [B, 1] sigmoid scores
    embs = emb_t.T[:num_graphs, :]               # [B, h2] == self.embs
    return out, embs


def init_params(key, num_features, latent_dim=(8, 8)):
    k1, k2, k3, k4, k5, k6 = jax.random.split(key, 6)
    w1 = jax.random.normal(k1, (num_features, latent_dim[0]), jnp.float32) * 0.1
    b1 = jax.random.normal(k2, (1, latent_dim[0]), jnp.float32) * 0.1
    w2 = jax.random.normal(k3, (latent_dim[0], latent_dim[1]), jnp.float32) * 0.1
    b2 = jax.random.normal(k4, (1, latent_dim[1]), jnp.float32) * 0.1
    wl = jax.random.normal(k5, (latent_dim[1], 1), jnp.float32) * 0.1   # Linear(8,1) weight^T
    bl = jax.random.normal(k6, (1, 1), jnp.float32) * 0.1
    return (w1, b1, w2, b2, wl, bl)


def reference_forward(x, edge_index, batch, params, num_graphs):
    """Pure-JAX f32 reference of the same forward pass (for a loose sanity check)."""
    w1, b1, w2, b2, wl, bl = params
    n = x.shape[0]
    src, dst = edge_index[0], edge_index[1]
    loops = jnp.arange(n, dtype=src.dtype)
    src = jnp.concatenate([src, loops])
    dst = jnp.concatenate([dst, loops])
    deg = jnp.zeros((n,), jnp.float32).at[dst].add(1.0)
    dinv = jnp.where(deg > 0, 1.0 / jnp.sqrt(deg), 0.0)
    a = jnp.zeros((n, n), jnp.float32).at[dst, src].add(dinv[src] * dinv[dst])
    h = jnp.maximum(a @ (x @ w1) + b1, 0.0)
    h = jnp.maximum(a @ (h @ w2) + b2, 0.0)
    p = (batch[None, :] == jnp.arange(num_graphs)[:, None]).astype(jnp.float32)
    pooled = p @ h
    return jax.nn.sigmoid(pooled @ wl + bl), pooled


if __name__ == "__main__":
    key = jax.random.PRNGKey(0)
    k_x, k_e, k_p = jax.random.split(key, 3)

    num_nodes = 16
    num_features = 4
    num_edges = 40
    num_graphs = 2

    x = jax.random.normal(k_x, (num_nodes, num_features), jnp.float32)
    edge_index = jax.random.randint(k_e, (2, num_edges), 0, num_nodes, jnp.int32)
    # first half of the nodes -> graph 0, second half -> graph 1
    batch = jnp.concatenate([
        jnp.zeros((num_nodes // 2,), jnp.int32),
        jnp.ones((num_nodes - num_nodes // 2,), jnp.int32),
    ])

    params = init_params(k_p, num_features)

    out, embs = gcn_conv_forward(x, edge_index, batch, params, num_graphs)
    jax.block_until_ready((out, embs))

    ref_out, ref_embs = reference_forward(x, edge_index, batch, params, num_graphs)
    assert out.shape == (num_graphs, 1) and embs.shape == (num_graphs, 8)
    assert bool(jnp.allclose(out, ref_out, rtol=5e-2, atol=5e-2))
    assert bool(jnp.allclose(embs, ref_embs, rtol=5e-2, atol=5e-2))

    print("KERNEL_OK")
</pallas_src>

<mosaic_0001>
module attributes {stable_mosaic.version = 11 : i64} {
  func.func @feature_transform_kernel(%arg0: i32, %arg1: memref<8x8xf32, #tpu.memory_space<vmem>>, %arg2: memref<8x128xf32, #tpu.memory_space<vmem>>, %arg3: memref<8x128xbf16, #tpu.memory_space<vmem>>) attributes {dimension_semantics = [#tpu.dimension_semantics<parallel>], iteration_bounds = array<i64: 1>, scalar_prefetch = 0 : i64, scratch_operands = 0 : i64, tpu.core_type = #tpu.core_type<tc>, window_params = [{pipeline_mode = #tpu.pipeline_mode<synchronous>, transform_indices = @transform_0, window_bounds = array<i64: 8, 8>}, {transform_indices = @transform_1, window_bounds = array<i64: 8, 128>}, {transform_indices = @transform_2, window_bounds = array<i64: 8, 128>}]} {
    %c0 = arith.constant 0 : index
    %c0_0 = arith.constant 0 : index
    %0 = vector.load %arg1[%c0, %c0_0] : memref<8x8xf32, #tpu.memory_space<vmem>>, vector<8x8xf32>
    %c0_1 = arith.constant 0 : index
    %c0_2 = arith.constant 0 : index
    %1 = vector.load %arg2[%c0_1, %c0_2] : memref<8x128xf32, #tpu.memory_space<vmem>>, vector<8x128xf32>
    %cst = arith.constant dense<0.000000e+00> : vector<8x128xf32>
    %2 = tpu.matmul %0, %1, %cst {dimension_numbers = #tpu.dot_dimension_numbers<[1], [0], [0], [1], [0, 0, 1, 1], [], []>} : vector<8x8xf32>, vector<8x128xf32>, vector<8x128xf32> -> vector<8x128xf32>
    %3 = arith.truncf %2 : vector<8x128xf32> to vector<8x128xbf16>
    %c0_3 = arith.constant 0 : index
    %c0_4 = arith.constant 0 : index
    %4 = vector.load %arg3[%c0_3, %c0_4] : memref<8x128xbf16, #tpu.memory_space<vmem>>, vector<8x128xbf16>
    tpu.vector_store %arg3[%c0_3, %c0_4], %3 {strides = array<i32>} : memref<8x128xbf16, #tpu.memory_space<vmem>>, vector<8x128xbf16>,
    return
  }
  func.func @transform_0(%arg0: i32) -> (i32, i32) {
    %c0_i32 = arith.constant 0 : i32
    %c0_i32_0 = arith.constant 0 : i32
    %c0_i32_1 = arith.constant 0 : i32
    return %c0_i32, %c0_i32_0 : i32, i32
  }
  func.func @transform_1(%arg0: i32) -> (i32, i32) {
    %c0_i32 = arith.constant 0 : i32
    %c0_i32_0 = arith.constant 0 : i32
    return %c0_i32, %arg0 : i32, i32
  }
  func.func @transform_2(%arg0: i32) -> (i32, i32) {
    %c0_i32 = arith.constant 0 : i32
    %c0_i32_0 = arith.constant 0 : i32
    return %c0_i32, %arg0 : i32, i32
  }
}

</mosaic_0001>

<llo_original>
// kernel: tpu_custom_call.1
$region0: #{tpu_custom_call.1}
  #allocation0 [shape = 'u32[]', space=smem, size = 0x4, offset = 0x4, fixed_abs, tag = 'smem constant byte address 0x4 - core index']
  #allocation1 [shape = 'u32[72,128]{1,0:T(1,128)}', space=vmem, size = 0x9000, scoped, tag = 'internal scratch']
  %s0 = inlined_call_operand.hbm [shape: f32[8,8], index: 0, kind: input, shape index: {}]
  %s1 = inlined_call_operand.hbm [shape: f32[8,128], index: 1, kind: input, shape index: {}]
  %s2 = inlined_call_operand.hbm [shape: bf16[8,128], index: 2, kind: output, shape index: {}]
  %s3 = sld [smem:[#allocation0]]
  $region26: #{tpu_custom_call.1} parent=0
    _
  %s5 = ssub.s32 1, %s3
  %s6 = scalar_select 0, %s5, %s3
  $region1: #{tpu_custom_call.1} parent=0
    #allocation2 [shape = 'u8[4096]{0}', space=vmem, size = 0x1000, scoped, tag = 'input window, operand 0, single buffered']
    #allocation3 [shape = 's32[1]{0}', space=sflag, size = 0x4, scoped, tag = 'scoped memory for tpu_custom_call.1']
    #allocation4 [shape = 's32[1]{0}', space=sflag, size = 0x4, scoped, tag = 'scoped memory for tpu_custom_call.1']
    #allocation5 [shape = 'u8[4096]{0}', space=vmem, size = 0x1000, scoped, tag = 'input window, operand 1, single buffered']
    #allocation6 [shape = 's32[1]{0}', space=sflag, size = 0x4, scoped, tag = 'scoped memory for tpu_custom_call.1']
    #allocation7 [shape = 'u8[2048]{0}', space=vmem, size = 0x800, scoped, tag = 'output window, operand 0, single buffered']
    %7 = vsyncpa [#allocation3], 0
    %8 = vsyncpa [#allocation6], 0
    %9 = vsyncpa [#allocation4], 0
    // Predicated region
    $region2: #{tpu_custom_call.1} parent=1 // pred_check
      _
    $region3: #{tpu_custom_call.1} parent=1 // pred_check_branch
      %11 = sbr.rel (0) target = $region5
    $region4: #{tpu_custom_call.1} parent=1 // pred_region
      %13 = vsyncadd [#allocation3], 0
      %s15 = sshll.u32 %s0, 4
      %s16 = int_to_ptr.hbm [resolvable:$true] %s15
      %s17 = sshll.u32 [#allocation2], 4
      %s18 = int_to_ptr.vmem [resolvable:$true] %s17
      %20 = dma.hbm_to_vmem [thread:$0]  %s16, 128, %s18, [#allocation3]
    $region5: #{tpu_custom_call.1} parent=1 // pred_fallthru
      _
    // Predicated region
    $region6: #{tpu_custom_call.1} parent=1 // pred_check
      _
    $region7: #{tpu_custom_call.1} parent=1 // pred_check_branch
      %22 = sbr.rel (0) target = $region9
    $region8: #{tpu_custom_call.1} parent=1 // pred_region
      %24 = vsyncadd [#allocation6], 0
      %s26 = sshll.u32 %s1, 4
      %s27 = int_to_ptr.hbm [resolvable:$true] %s26
      %s28 = sshll.u32 [#allocation5], 4
      %s29 = int_to_ptr.vmem [resolvable:$true] %s28
      %31 = dma.hbm_to_vmem [thread:$0]  %s27, 128, %s29, [#allocation6]
    $region9: #{tpu_custom_call.1} parent=1 // pred_fallthru
      _
    // Predicated region
    $region10: #{tpu_custom_call.1} parent=1 // pred_check
      _
    $region11: #{tpu_custom_call.1} parent=1 // pred_check_branch
      %33 = sbr.rel (0) target = $region13
    $region12: #{tpu_custom_call.1} parent=1 // pred_region
      %35 = dma.done [#allocation3], 128
    $region13: #{tpu_custom_call.1} parent=1 // pred_fallthru
      _
    // Predicated region
    $region14: #{tpu_custom_call.1} parent=1 // pred_check
      _
    $region15: #{tpu_custom_call.1} parent=1 // pred_check_branch
      %37 = sbr.rel (0) target = $region17
    $region16: #{tpu_custom_call.1} parent=1 // pred_region
      %39 = dma.done [#allocation6], 128
    $region17: #{tpu_custom_call.1} parent=1 // pred_fallthru
      _
    %v40 = vld [vmem:[#allocation2] sm:$0xff]
    %v41 = vld [vmem:[#allocation5] sm:$0xff]
    %vm42 = vcmask 64512
    %v44 = vsel %vm42, %v40, 0
    %46 = vmatpush.msra.mxu0 0.0
    %47 = vmatpush.msra.mxu0 0.0
    %48 = vmatpush.msra.mxu0 0.0
    %49 = vmatpush.msra.mxu0 0.0
    %50 = vmatpush.msra.mxu0 0.0
    %51 = vmatpush.msra.mxu0 0.0
    %52 = vmatpush.msra.mxu0 0.0
    %53 = vmatpush.msra.mxu0 0.0
    %54 = vmatpush.msra.mxu0 0.0
    %55 = vmatpush.msra.mxu0 0.0
    %56 = vmatpush.msra.mxu0 0.0
    %57 = vmatpush.msra.mxu0 0.0
    %58 = vmatpush.msra.mxu0 0.0
    %59 = vmatpush.msra.mxu0 0.0
    %60 = vmatpush.msra.mxu0 0.0
    %61 = vmatpush.msra.mxu0 %v41
    %62 = vmatmul.f32.gmra.mxu0 %v44
    %v63 = vpop.f32.mrf.mxu0
    %v64 = vadd.f32 0.0, %v63
    %65 = vdwg.mxu0
    %v66 = vpack.c.bf16 %v64, %v64
    %67 = vst [vmem:[#allocation7] sm:$0xf] %v66
    // Predicated region
    $region18: #{tpu_custom_call.1} parent=1 // pred_check
      _
    $region19: #{tpu_custom_call.1} parent=1 // pred_check_branch
      %69 = sbr.rel (0) target = $region21
    $region20: #{tpu_custom_call.1} parent=1 // pred_region
      %71 = vsyncadd [#allocation4], 0
      %s73 = sshll.u32 [#allocation7], 4
      %s74 = int_to_ptr.vmem [resolvable:$true] %s73
      %s75 = sshll.u32 %s2, 4
      %s76 = int_to_ptr.hbm [resolvable:$true] %s75
      %78 = dma.vmem_to_hbm [thread:$0]  %s74, 64, %s76, [#allocation4]
    $region21: #{tpu_custom_call.1} parent=1 // pred_fallthru
      _
    // Predicated region
    $region22: #{tpu_custom_call.1} parent=1 // pred_check
      _
    $region23: #{tpu_custom_call.1} parent=1 // pred_check_branch
      %80 = sbr.rel (0) target = $region25
    $region24: #{tpu_custom_call.1} parent=1 // pred_region
      %82 = dma.done [#allocation4], 64
    $region25: #{tpu_custom_call.1} parent=1 // pred_fallthru
      _
    %83 = vsyncpa [#allocation3], 1
    %84 = vsyncpa [#allocation6], 1
    %85 = vsyncpa [#allocation4], 1

</llo_original>
